<compile_context>
chip_gen: v7x
topology: tpu7x:2x2x1
jax: 0.10.0
libtpu: 0.0.40
codegen_flags: <defaults>
</compile_context>

<pallas_src>
import jax
import jax.numpy as jnp
from jax.experimental import pallas as pl
from jax.experimental.pallas import tpu as pltpu


# ---------------------------------------------------------------------------
# Kernels
# ---------------------------------------------------------------------------
def _rope_kernel_3d(x_ref, sin_ref, cos_ref, o_ref):
    # x_ref: (H_CHUNK, S_TILE, D); sin_ref/cos_ref: (S_TILE, D) float32.
    x = x_ref[...].astype(jnp.float32)             # full-precision compute (spec)
    half = x.shape[-1] // 2
    rot = jnp.concatenate([-x[..., half:], x[..., :half]], axis=-1)  # rotate_half
    out = x * cos_ref[...][None] + rot * sin_ref[...][None]
    o_ref[...] = out.astype(o_ref.dtype)


def _rope_kernel_2d(x_ref, sin_ref, cos_ref, o_ref):
    # Decode path (seq == 1): x_ref (H_TILE, D); sin_ref/cos_ref (1, D).
    x = x_ref[...].astype(jnp.float32)
    half = x.shape[-1] // 2
    rot = jnp.concatenate([-x[:, half:], x[:, :half]], axis=-1)
    o_ref[...] = (x * cos_ref[...] + rot * sin_ref[...]).astype(o_ref.dtype)


# ---------------------------------------------------------------------------
# Tiling / VMEM budgeting helpers
# ---------------------------------------------------------------------------
_SEQ_TILE_CAP = 1024                 # rows per block before chunking seq
_MAX_TILE_BYTES = 8 * 1024 * 1024    # hard cap on a single x / out tile


def _vmem_capacity_bytes() -> int:
    try:
        return int(pltpu.get_tpu_info().vmem_capacity_bytes)
    except Exception:
        return 64 * 1024 * 1024      # conservative (v7x-sized) fallback


def _num_tensorcores_per_chip() -> int:
    # v5e / v6e have a single TensorCore; v7x (and v4/v5p megacore) have 2.
    try:
        kind = jax.devices()[0].device_kind.lower()
    except Exception:
        return 1
    if "lite" in kind or "v5e" in kind or "v6e" in kind:
        return 1
    return 2


def _per_buffer_budget(vmem_cap: int) -> int:
    # Resident VMEM is ~2*(x tile) + 2*(out tile) + sin/cos tiles + compiler
    # scratch, so keep a single tile <= ~1/10 of physical VMEM
    # (v7x 64 MiB -> ~6.4 MiB tiles, v5e/v6e 128 MiB -> 8 MiB tiles).
    return max(1 << 20, min(_MAX_TILE_BYTES, vmem_cap // 10))


def _round_down_mult(x: int, m: int) -> int:
    return max(m, (x // m) * m)


def _pick_tiles_3d(bh, seq, dim, itemsize, per_buf, multi_core):
    row_bytes = dim * itemsize
    s_tile = seq if seq <= _SEQ_TILE_CAP else _SEQ_TILE_CAP
    if s_tile < seq:
        s_tile = _round_down_mult(s_tile, 8)        # (8,128) rule on 2nd-minor dim
    h_chunk = max(1, per_buf // (s_tile * row_bytes))
    h_chunk = min(h_chunk, bh)
    if h_chunk == bh and s_tile < seq:
        # All heads fit in one chunk; grow the seq tile to use the budget.
        s_tile = min(seq, per_buf // (bh * row_bytes))
        if s_tile < seq:
            s_tile = _round_down_mult(s_tile, 8)
    # On 2-TensorCore chips keep >= 2 grid steps along a parallel axis so one
    # core does not idle.  No-op on single-core v5e/v6e (grid is a serial loop).
    if multi_core and pl.cdiv(bh, h_chunk) * pl.cdiv(seq, s_tile) < 2:
        if bh >= 2:
            h_chunk = pl.cdiv(bh, 2)
        elif seq >= 16:
            s_tile = _round_down_mult(pl.cdiv(seq, 2), 8)
    return h_chunk, s_tile


def _pick_tile_2d(bh, dim, itemsize, per_buf, multi_core):
    rows = max(8, per_buf // (dim * itemsize))
    h_tile = bh if bh <= rows else _round_down_mult(rows, 8)
    if multi_core and h_tile == bh and bh >= 16:
        h_tile = _round_down_mult(pl.cdiv(bh, 2), 8)
    return h_tile


def _vmem_limit(vmem_cap, tile_bytes, table_tile_bytes):
    # 2x double-buffered x + 2x double-buffered out + sin/cos + headroom,
    # clamped to 3/4 of physical VMEM.
    computed = 4 * tile_bytes + 4 * table_tile_bytes + (8 << 20)
    return min((vmem_cap * 3) // 4, max(32 << 20, computed))


# ---------------------------------------------------------------------------
# pallas_call wrapper
# ---------------------------------------------------------------------------
def _apply_rope_pallas(x, sin, cos):
    """x: [B, H, S, D]; sin/cos: [S, D] float32.  Returns same shape/dtype as x."""
    B, H, S, D = x.shape
    BH = B * H
    itemsize = x.dtype.itemsize
    vmem_cap = _vmem_capacity_bytes()
    per_buf = _per_buffer_budget(vmem_cap)
    multi_core = _num_tensorcores_per_chip() >= 2

    if S == 1:
        # Decode: pack heads onto sublanes ([BH, D]) for full vreg occupancy
        # and unmasked lane-dense stores.
        x2d = x.reshape(BH, D)
        h_tile = _pick_tile_2d(BH, D, itemsize, per_buf, multi_core)
        out = pl.pallas_call(
            _rope_kernel_2d,
            out_shape=jax.ShapeDtypeStruct((BH, D), x.dtype),
            grid=(pl.cdiv(BH, h_tile),),
            in_specs=[
                pl.BlockSpec((h_tile, D), lambda h: (h, 0)),
                pl.BlockSpec((1, D), lambda h: (0, 0)),
                pl.BlockSpec((1, D), lambda h: (0, 0)),
            ],
            out_specs=pl.BlockSpec((h_tile, D), lambda h: (h, 0)),
            compiler_params=pltpu.CompilerParams(
                dimension_semantics=("parallel",),
                vmem_limit_bytes=_vmem_limit(vmem_cap, h_tile * D * itemsize,
                                             D * 4),
            ),
        )(x2d, sin, cos)
        return out.reshape(B, H, S, D)

    x_flat = x.reshape(BH, S, D)
    h_chunk, s_tile = _pick_tiles_3d(BH, S, D, itemsize, per_buf, multi_core)
    # seq-tile axis OUTER, head-chunk axis INNER: the sin/cos block index only
    # depends on the outer axis, so those tiles are fetched once per seq tile
    # and reused across every head chunk.
    grid = (pl.cdiv(S, s_tile), pl.cdiv(BH, h_chunk))
    out = pl.pallas_call(
        _rope_kernel_3d,
        out_shape=jax.ShapeDtypeStruct((BH, S, D), x.dtype),
        grid=grid,
        in_specs=[
            pl.BlockSpec((h_chunk, s_tile, D), lambda s, h: (h, s, 0)),
            pl.BlockSpec((s_tile, D), lambda s, h: (s, 0)),
            pl.BlockSpec((s_tile, D), lambda s, h: (s, 0)),
        ],
        out_specs=pl.BlockSpec((h_chunk, s_tile, D), lambda s, h: (h, s, 0)),
        compiler_params=pltpu.CompilerParams(
            dimension_semantics=("parallel", "parallel"),
            vmem_limit_bytes=_vmem_limit(vmem_cap,
                                         h_chunk * s_tile * D * itemsize,
                                         s_tile * D * 4),
        ),
    )(x_flat, sin, cos)
    return out.reshape(B, H, S, D)


# ---------------------------------------------------------------------------
# Module port
# ---------------------------------------------------------------------------
class OpenELMRotaryEmbeddingPallas:
    """JAX/Pallas port of OpenELMRotaryEmbedding."""

    def __init__(self, model_dim: int, max_seq_length: int,
                 freq_constant: int = 10000):
        assert model_dim % 2 == 0, "model_dim must be even for RoPE."
        self.model_dim = model_dim
        self.max_seq_length = max_seq_length
        self.freq_constant = freq_constant
        self.inv_freq = 1.0 / (
            freq_constant ** (jnp.arange(0, model_dim, 2, dtype=jnp.float32)
                              / model_dim))
        self._cached_seq_length = max_seq_length
        self._cached_cos = None
        self._cached_sin = None
        self._build_cache(max_seq_length)

    def _build_cache(self, key_len: int):
        self._cached_seq_length = max(key_len, self._cached_seq_length)
        pos = jnp.arange(self._cached_seq_length, dtype=jnp.float32)
        theta = jnp.einsum("i,j->ij", pos, self.inv_freq)        # [S, D/2]
        emb = jnp.concatenate([theta, theta], axis=-1)           # [S, D]
        self._cached_cos = jnp.cos(emb)      # float32, matches torch buffer
        self._cached_sin = jnp.sin(emb)

    def __call__(self, query, key):
        # query: [B, Hq, Sq, D]; key: [B, Hk, Sk, D]
        dim = key.shape[-1]
        key_len = key.shape[2]
        query_len = query.shape[2]
        assert dim == self.model_dim
        assert key.dtype == query.dtype
        assert key_len >= query_len
        if key_len > self._cached_seq_length or self._cached_cos is None:
            self._build_cache(key_len)

        sin_q = self._cached_sin[key_len - query_len:key_len, :]
        cos_q = self._cached_cos[key_len - query_len:key_len, :]
        sin_k = self._cached_sin[:key_len, :]
        cos_k = self._cached_cos[:key_len, :]

        # TODO(synk): fuse q/k into one pallas_call via scalar-prefetched seq
        # offsets into the full cached tables to halve launch overhead on the
        # decode path.
        q_out = _apply_rope_pallas(query, sin_q, cos_q)
        k_out = _apply_rope_pallas(key, sin_k, cos_k)
        return q_out, k_out


# ---------------------------------------------------------------------------
# Reference + self-test
# ---------------------------------------------------------------------------
def _reference_rope(x, sin, cos):
    xf = x.astype(jnp.float32)
    half = xf.shape[-1] // 2
    rot = jnp.concatenate([-xf[..., half:], xf[..., :half]], axis=-1)
    return (xf * cos[None, None] + rot * sin[None, None]).astype(x.dtype)


if __name__ == "__main__":
    # TODO(synk): head_dim=64 models would benefit from packing two heads per
    # 128-lane row for lane-dense stores; only D=128 is exercised here.
    rng = jax.random.PRNGKey(0)
    kq, kk, kq2, kk2 = jax.random.split(rng, 4)

    rope = OpenELMRotaryEmbeddingPallas(model_dim=128, max_seq_length=256)

    # --- prefill-shaped check: B=2, Hq=4, Hk=2, Sq=Sk=128, D=128 -----------
    B, Hq, Hk, Sq, Sk, D = 2, 4, 2, 128, 128, 128
    query = jax.random.normal(kq, (B, Hq, Sq, D), dtype=jnp.float32)
    key = jax.random.normal(kk, (B, Hk, Sk, D), dtype=jnp.float32)
    q_out, k_out = rope(query, key)
    q_out = jax.block_until_ready(q_out)
    k_out = jax.block_until_ready(k_out)

    q_ref = _reference_rope(query, rope._cached_sin[Sk - Sq:Sk],
                            rope._cached_cos[Sk - Sq:Sk])
    k_ref = _reference_rope(key, rope._cached_sin[:Sk], rope._cached_cos[:Sk])
    assert q_out.shape == query.shape and q_out.dtype == query.dtype
    assert k_out.shape == key.shape and k_out.dtype == key.dtype
    assert jnp.allclose(q_out, q_ref, atol=1e-5, rtol=1e-5)
    assert jnp.allclose(k_out, k_ref, atol=1e-5, rtol=1e-5)

    # --- decode-shaped check: Sq=1 (2-D sublane-packed path) ---------------
    Sq2, Sk2 = 1, 96
    query2 = jax.random.normal(kq2, (B, Hq, Sq2, D), dtype=jnp.float32)
    key2 = jax.random.normal(kk2, (B, Hk, Sk2, D), dtype=jnp.float32)
    q2_out, k2_out = rope(query2, key2)
    q2_out = jax.block_until_ready(q2_out)
    k2_out = jax.block_until_ready(k2_out)

    q2_ref = _reference_rope(query2, rope._cached_sin[Sk2 - Sq2:Sk2],
                             rope._cached_cos[Sk2 - Sq2:Sk2])
    k2_ref = _reference_rope(key2, rope._cached_sin[:Sk2],
                             rope._cached_cos[:Sk2])
    assert jnp.allclose(q2_out, q2_ref, atol=1e-5, rtol=1e-5)
    assert jnp.allclose(k2_out, k2_ref, atol=1e-5, rtol=1e-5)

    print("KERNEL_OK")
</pallas_src>

<mosaic_0001>
module attributes {stable_mosaic.version = 11 : i64} {
  func.func @_rope_kernel_3d(%arg0: i32, %arg1: i32, %arg2: memref<4x128x128xf32, #tpu.memory_space<vmem>>, %arg3: memref<128x128xf32, #tpu.memory_space<vmem>>, %arg4: memref<128x128xf32, #tpu.memory_space<vmem>>, %arg5: memref<4x128x128xf32, #tpu.memory_space<vmem>>) attributes {dimension_semantics = [#tpu.dimension_semantics<parallel>, #tpu.dimension_semantics<parallel>], iteration_bounds = array<i64: 1, 2>, scalar_prefetch = 0 : i64, scratch_operands = 0 : i64, tpu.core_type = #tpu.core_type<tc>, window_params = [{transform_indices = @transform_0, window_bounds = array<i64: 4, 128, 128>}, {transform_indices = @transform_1, window_bounds = array<i64: 128, 128>}, {transform_indices = @transform_2, window_bounds = array<i64: 128, 128>}, {transform_indices = @transform_3, window_bounds = array<i64: 4, 128, 128>}]} {
    %c0 = arith.constant 0 : index
    %c0_0 = arith.constant 0 : index
    %c0_1 = arith.constant 0 : index
    %0 = vector.load %arg2[%c0, %c0_0, %c0_1] : memref<4x128x128xf32, #tpu.memory_space<vmem>>, vector<4x128x128xf32>
    %1 = vector.extract_strided_slice %0 {offsets = [0, 0, 64], sizes = [4, 128, 64], strides = [1, 1, 1]} : vector<4x128x128xf32> to vector<4x128x64xf32>
    %cst = arith.constant 0.000000e+00 : f32
    %2 = vector.broadcast %cst : f32 to vector<4x128x64xf32>
    %3 = arith.subf %2, %1 : vector<4x128x64xf32>
    %4 = vector.extract_strided_slice %0 {offsets = [0, 0, 0], sizes = [4, 128, 64], strides = [1, 1, 1]} : vector<4x128x128xf32> to vector<4x128x64xf32>
    %5 = tpu.concatenate %3, %4 in 2 : vector<4x128x64xf32>, vector<4x128x64xf32> -> vector<4x128x128xf32>
    %c0_2 = arith.constant 0 : index
    %c0_3 = arith.constant 0 : index
    %6 = vector.load %arg4[%c0_2, %c0_3] : memref<128x128xf32, #tpu.memory_space<vmem>>, vector<128x128xf32>
    %7 = vector.shape_cast %6 : vector<128x128xf32> to vector<1x128x128xf32>
    %8 = vector.broadcast %7 : vector<1x128x128xf32> to vector<4x128x128xf32>
    %9 = arith.mulf %0, %8 : vector<4x128x128xf32>
    %c0_4 = arith.constant 0 : index
    %c0_5 = arith.constant 0 : index
    %10 = vector.load %arg3[%c0_4, %c0_5] : memref<128x128xf32, #tpu.memory_space<vmem>>, vector<128x128xf32>
    %11 = vector.shape_cast %10 : vector<128x128xf32> to vector<1x128x128xf32>
    %12 = vector.broadcast %11 : vector<1x128x128xf32> to vector<4x128x128xf32>
    %13 = arith.mulf %5, %12 : vector<4x128x128xf32>
    %14 = arith.addf %9, %13 : vector<4x128x128xf32>
    %c0_6 = arith.constant 0 : index
    %c0_7 = arith.constant 0 : index
    %c0_8 = arith.constant 0 : index
    %15 = vector.load %arg5[%c0_6, %c0_7, %c0_8] : memref<4x128x128xf32, #tpu.memory_space<vmem>>, vector<4x128x128xf32>
    tpu.vector_store %arg5[%c0_6, %c0_7, %c0_8], %14 {strides = array<i32>} : memref<4x128x128xf32, #tpu.memory_space<vmem>>, vector<4x128x128xf32>,
    return
  }
  func.func @transform_0(%arg0: i32, %arg1: i32) -> (i32, i32, i32) {
    %c0_i32 = arith.constant 0 : i32
    %c0_i32_0 = arith.constant 0 : i32
    return %arg1, %arg0, %c0_i32 : i32, i32, i32
  }
  func.func @transform_1(%arg0: i32, %arg1: i32) -> (i32, i32) {
    %c0_i32 = arith.constant 0 : i32
    %c0_i32_0 = arith.constant 0 : i32
    return %arg0, %c0_i32 : i32, i32
  }
  func.func @transform_2(%arg0: i32, %arg1: i32) -> (i32, i32) {
    %c0_i32 = arith.constant 0 : i32
    %c0_i32_0 = arith.constant 0 : i32
    return %arg0, %c0_i32 : i32, i32
  }
  func.func @transform_3(%arg0: i32, %arg1: i32) -> (i32, i32, i32) {
    %c0_i32 = arith.constant 0 : i32
    %c0_i32_0 = arith.constant 0 : i32
    return %arg1, %arg0, %c0_i32 : i32, i32, i32
  }
}

</mosaic_0001>

<llo_original>
// kernel: tpu_custom_call.1
$region0: #{tpu_custom_call.1}
  #allocation0 [shape = 'u32[]', space=smem, size = 0x4, offset = 0x4, fixed_abs, tag = 'smem constant byte address 0x4 - core index']
  #allocation1 [shape = 'u32[144,128]{1,0:T(1,128)}', space=vmem, size = 0x12000, scoped, tag = 'internal scratch']
  %s0 = inlined_call_operand.hbm [shape: f32[8,128,128], index: 0, kind: input, shape index: {}]
  %s1 = inlined_call_operand.hbm [shape: f32[128,128], index: 1, kind: input, shape index: {}]
  %s2 = inlined_call_operand.hbm [shape: f32[128,128], index: 2, kind: input, shape index: {}]
  %s3 = inlined_call_operand.hbm [shape: f32[8,128,128], index: 3, kind: output, shape index: {}]
  %s4 = sld [smem:[#allocation0]]
  $region57: #{tpu_custom_call.1} parent=0
    _
  %s6 = ssub.s32 1, %s4
  %s7 = scalar_select 0, %s6, %s4
  $region1: #{tpu_custom_call.1} parent=0
    #allocation2 [shape = 'u8[524288]{0}', space=vmem, size = 0x80000, scoped, tag = 'input window, operand 0']
    #allocation3 [shape = 's32[2]{0}', space=sflag, size = 0x8, scoped, tag = 'scoped memory for tpu_custom_call.1']
    #allocation4 [shape = 's32[2]{0}', space=sflag, size = 0x8, scoped, tag = 'scoped memory for tpu_custom_call.1']
    #allocation5 [shape = 'u8[65536]{0}', space=vmem, size = 0x10000, scoped, tag = 'input window, operand 1, single buffered']
    #allocation6 [shape = 's32[1]{0}', space=sflag, size = 0x4, scoped, tag = 'scoped memory for tpu_custom_call.1']
    #allocation7 [shape = 'u8[65536]{0}', space=vmem, size = 0x10000, scoped, tag = 'input window, operand 2, single buffered']
    #allocation8 [shape = 'u8[524288]{0}', space=vmem, size = 0x80000, scoped, tag = 'output window, operand 0']
    %8 = vsyncpa [#allocation3], 0
    %s9 = scalar_lea.sflag [#allocation3], 1
    %10 = vsyncpa %s9, 0
    %11 = vsyncpa [#allocation6], 0
    %12 = vsyncpa [#allocation4], 0
    %s13 = scalar_lea.sflag [#allocation4], 1
    %14 = vsyncpa %s13, 0
    loop: start=0, step=1, limit=4
    $region2: #{tpu_custom_call.1} parent=1 // loop_pre_header
      _
    $region3: #{tpu_custom_call.1} parent=1 // loop_header
      %s16 = sphi 0, %s20
      %p17 = scmp.ge.s32.totalorder %s16, 4
      %s23 = sphi 0, %s35
      %s24 = sphi 0, %s31
      %s25 = sphi 0, %s23
      %s26 = sphi 0, %s24
      %s27 = sphi 0, %s25
      %s28 = sphi 0, %s26
      %s40 = sphi 0, %s42
      %s43 = sphi 0, %s40
      %s44 = sphi 0, %s43
      %s60 = sphi 0, %s44
      %s66 = sphi 0, %s68
      %s69 = sphi 0, %s66
      %s70 = sphi 0, %s69
      %s86 = sphi 0, %s70
      %s92 = sphi 0, %s94
      %s95 = sphi 0, %s92
      %s96 = sphi 0, %s95
      %s112 = sphi 0, %s96
      %s120 = sphi 0, %s122
      %s123 = sphi 0, %s120
      %s124 = sphi 0, %s123
      %s140 = sphi 0, %s124
    $region4: #{tpu_custom_call.1} parent=1 // loop_header_branch
      %19 = sbr.rel (%p17) target = $region8
    $region5: #{tpu_custom_call.1} parent=1 // loop_body
      %s21 = ssub.s32 %s16, 1
      %s22 = ssub.s32 %s16, 2
      %s29 = sadd.s32 1, %s24
      %p30 = scmp.ge.s32.totalorder %s29, 2
      %s31 = scalar_select %p30, 0, %s29
      %s32 = sadd.s32 1, %s23
      %s33 = scalar_select %p30, %s32, %s23
      %p34 = scmp.ge.s32.totalorder %s33, 1
      %s35 = scalar_select %p34, 0, %s33
      %s36 = ssub.s32 %s24, %s31
      %s37 = ssub.s32 %s23, %s35
      %s38 = sor.u32 %s36, %s37
      %p39 = scmp.eq.s32.totalorder %s38, 0
      %s41 = sadd.s32 %s40, 1
      %s42 = scalar_select %p39, %s40, %s41
      %p45 = pneg %p39
      %p46 = scmp.eq.s32.totalorder %s16, 1
      %p47 = por %p45, %p46
      %p48 = scmp.ne.s32.totalorder %s40, %s43
      %p49 = scmp.eq.s32.totalorder %s16, 0
      %p50 = por %p48, %p49
      %p51 = scmp.ne.s32.totalorder %s40, %s43
      %p52 = scmp.eq.s32.totalorder %s21, 1
      %p53 = por %p51, %p52
      %p54 = scmp.ne.s32.totalorder %s43, %s44
      %p55 = scmp.eq.s32.totalorder %s21, 0
      %p56 = por %p54, %p55
      %p57 = scmp.ne.s32.totalorder %s43, %s44
      %p58 = scmp.eq.s32.totalorder %s22, 1
      %p59 = por %p57, %p58
      %p61 = scmp.ne.s32.totalorder %s44, %s60
      %p62 = scmp.eq.s32.totalorder %s22, 0
      %p63 = por %p61, %p62
      %s64 = ssub.s32 %s23, %s35
      %p65 = scmp.eq.s32.totalorder %s64, 0
      %s67 = sadd.s32 %s66, 1
      %s68 = scalar_select %p65, %s66, %s67
      %p71 = pneg %p65
      %p72 = scmp.eq.s32.totalorder %s16, 1
      %p73 = por %p71, %p72
      %p74 = scmp.ne.s32.totalorder %s66, %s69
      %p75 = scmp.eq.s32.totalorder %s16, 0
      %p76 = por %p74, %p75
      %p77 = scmp.ne.s32.totalorder %s66, %s69
      %p78 = scmp.eq.s32.totalorder %s21, 1
      %p79 = por %p77, %p78
      %p80 = scmp.ne.s32.totalorder %s69, %s70
      %p81 = scmp.eq.s32.totalorder %s21, 0
      %p82 = por %p80, %p81
      %p83 = scmp.ne.s32.totalorder %s69, %s70
      %p84 = scmp.eq.s32.totalorder %s22, 1
      %p85 = por %p83, %p84
      %p87 = scmp.ne.s32.totalorder %s70, %s86
      %p88 = scmp.eq.s32.totalorder %s22, 0
      %p89 = por %p87, %p88
      %s90 = ssub.s32 %s23, %s35
      %p91 = scmp.eq.s32.totalorder %s90, 0
      %s93 = sadd.s32 %s92, 1
      %s94 = scalar_select %p91, %s92, %s93
      %p97 = pneg %p91
      %p98 = scmp.eq.s32.totalorder %s16, 1
      %p99 = por %p97, %p98
      %p100 = scmp.ne.s32.totalorder %s92, %s95
      %p101 = scmp.eq.s32.totalorder %s16, 0
      %p102 = por %p100, %p101
      %p103 = scmp.ne.s32.totalorder %s92, %s95
      %p104 = scmp.eq.s32.totalorder %s21, 1
      %p105 = por %p103, %p104
      %p106 = scmp.ne.s32.totalorder %s95, %s96
      %p107 = scmp.eq.s32.totalorder %s21, 0
      %p108 = por %p106, %p107
      %p109 = scmp.ne.s32.totalorder %s95, %s96
      %p110 = scmp.eq.s32.totalorder %s22, 1
      %p111 = por %p109, %p110
      %p113 = scmp.ne.s32.totalorder %s96, %s112
      %p114 = scmp.eq.s32.totalorder %s22, 0
      %p115 = por %p113, %p114
      %s116 = ssub.s32 %s24, %s31
      %s117 = ssub.s32 %s23, %s35
      %s118 = sor.u32 %s116, %s117
      %p119 = scmp.eq.s32.totalorder %s118, 0
      %s121 = sadd.s32 %s120, 1
      %s122 = scalar_select %p119, %s120, %s121
      %p125 = pneg %p119
      %p126 = scmp.eq.s32.totalorder %s16, 1
      %p127 = por %p125, %p126
      %p128 = scmp.ne.s32.totalorder %s120, %s123
      %p129 = scmp.eq.s32.totalorder %s16, 0
      %p130 = por %p128, %p129
      %p131 = scmp.ne.s32.totalorder %s120, %s123
      %p132 = scmp.eq.s32.totalorder %s21, 1
      %p133 = por %p131, %p132
      %p134 = scmp.ne.s32.totalorder %s123, %s124
      %p135 = scmp.eq.s32.totalorder %s21, 0
      %p136 = por %p134, %p135
      %p137 = scmp.ne.s32.totalorder %s123, %s124
      %p138 = scmp.eq.s32.totalorder %s22, 1
      %p139 = por %p137, %p138
      %p141 = scmp.ne.s32.totalorder %s124, %s140
      %p142 = scmp.eq.s32.totalorder %s22, 0
      %p143 = por %p141, %p142
      %p144 = scmp.le.s32.totalorder 1, %s16
      %p145 = scmp.lt.s32.totalorder %s16, 3
      %p146 = pnand %p144, %p145
      %p147 = pneg %p146
      // Predicated region
      $region9: #{tpu_custom_call.1} parent=5 // pred_check
        _
      $region10: #{tpu_custom_call.1} parent=5 // pred_check_branch
        %149 = sbr.rel (%p146) target = $region12
      $region11: #{tpu_custom_call.1} parent=5 // pred_region
        %s150 = ssub.s32 %s16, 1
        // Predicated region
        $region13: #{tpu_custom_call.1} parent=11 // pred_check
          %p151 = pneg %p82
        $region14: #{tpu_custom_call.1} parent=11 // pred_check_branch
          %153 = sbr.rel (%p151) target = $region16
        $region15: #{tpu_custom_call.1} parent=11 // pred_region
          %s154 = smul.u32 16, %s25
          %s156 = ssub.s32 2048, 2048
          %157 = vsyncadd [#allocation6], %s156
          %s158 = smul.addr %s154, 128
          %s159 = scalar_lea.hbm %s1, %s158
          %s160 = sshll.u32 [#allocation5], 4
          %s161 = int_to_ptr.vmem [resolvable:$true] %s160
          %166 = dma.hbm_to_vmem [thread:$0]  %s159, 2048, %s161, [#allocation6], 128, 128, 8
        $region16: #{tpu_custom_call.1} parent=11 // pred_fallthru
          _
        // Predicated region
        $region17: #{tpu_custom_call.1} parent=11 // pred_check
          %p167 = pneg %p108
        $region18: #{tpu_custom_call.1} parent=11 // pred_check_branch
          %169 = sbr.rel (%p167) target = $region20
        $region19: #{tpu_custom_call.1} parent=11 // pred_region
          %s170 = smul.u32 16, %s25
          %s172 = ssub.s32 2048, 2048
          %173 = vsyncadd [#allocation6], %s172
          %s174 = smul.addr %s170, 128
          %s175 = scalar_lea.hbm %s2, %s174
          %s176 = sshll.u32 [#allocation7], 4
          %s177 = int_to_ptr.vmem [resolvable:$true] %s176
          %182 = dma.hbm_to_vmem [thread:$0]  %s175, 2048, %s177, [#allocation6], 128, 128, 8
        $region20: #{tpu_custom_call.1} parent=11 // pred_fallthru
          _
      $region12: #{tpu_custom_call.1} parent=5 // pred_fallthru
        _
      %p183 = scmp.lt.s32.totalorder %s16, 2
      // Predicated region
      $region21: #{tpu_custom_call.1} parent=5 // pred_check
        %p184 = pneg %p183
      $region22: #{tpu_custom_call.1} parent=5 // pred_check_branch
        %186 = sbr.rel (%p184) target = $region24
      $region23: #{tpu_custom_call.1} parent=5 // pred_region
        // Predicated region
        $region25: #{tpu_custom_call.1} parent=23 // pred_check
          %p187 = pneg %p50
        $region26: #{tpu_custom_call.1} parent=23 // pred_check_branch
          %189 = sbr.rel (%p187) target = $region28
        $region27: #{tpu_custom_call.1} parent=23 // pred_region
          %s190 = sand.u32 %s40, 1
          %s191 = scalar_lea.sflag [#allocation3], %s190
          %s192 = sand.u32 %s40, 1
          %s193 = smul.addr %s192, 512
          %s194 = scalar_lea.vmem [#allocation2], %s193
          %s195 = smul.u32 4, %s24
          %s196 = smul.u32 16, %s23
          %s198 = ssub.s32 8192, 8192
          %199 = vsyncadd %s191, %s198
          %s200 = smul.addr %s195, 16
          %s201 = sadd.s32 %s196, %s200
          %s202 = smul.addr %s201, 128
          %s203 = scalar_lea.hbm %s0, %s202
          %s204 = sshll.u32 %s194, 4
          %s205 = int_to_ptr.vmem [resolvable:$true] %s204
          %210 = dma.hbm_to_vmem [thread:$0]  %s203, 8192, %s205, %s191, 128, 128, 8
        $region28: #{tpu_custom_call.1} parent=23 // pred_fallthru
          _
      $region24: #{tpu_custom_call.1} parent=5 // pred_fallthru
        _
      %p211 = scmp.le.s32.totalorder 1, %s16
      %p212 = scmp.lt.s32.totalorder %s16, 3
      %p213 = pnand %p211, %p212
      %p214 = pneg %p213
      // Predicated region
      $region29: #{tpu_custom_call.1} parent=5 // pred_check
        _
      $region30: #{tpu_custom_call.1} parent=5 // pred_check_branch
        %216 = sbr.rel (%p213) target = $region32
      $region31: #{tpu_custom_call.1} parent=5 // pred_region
        %s217 = ssub.s32 %s16, 1
        %s218 = sand.u32 %s43, 1
        %s219 = scalar_lea.sflag [#allocation3], %s218
        %s220 = sand.u32 %s43, 1
        %s221 = smul.addr %s220, 512
        %s222 = scalar_lea.vmem [#allocation2], %s221
        // Predicated region
        $region33: #{tpu_custom_call.1} parent=31 // pred_check
          %p223 = pneg %p56
        $region34: #{tpu_custom_call.1} parent=31 // pred_check_branch
          %225 = sbr.rel (%p223) target = $region36
        $region35: #{tpu_custom_call.1} parent=31 // pred_region
          %226 = dma.done %s219, 8192
        $region36: #{tpu_custom_call.1} parent=31 // pred_fallthru
          _
        // Predicated region
        $region37: #{tpu_custom_call.1} parent=31 // pred_check
          %p227 = pneg %p82
        $region38: #{tpu_custom_call.1} parent=31 // pred_check_branch
          %229 = sbr.rel (%p227) target = $region40
        $region39: #{tpu_custom_call.1} parent=31 // pred_region
          %230 = dma.done [#allocation6], 2048
        $region40: #{tpu_custom_call.1} parent=31 // pred_fallthru
          _
        // Predicated region
        $region41: #{tpu_custom_call.1} parent=31 // pred_check
          %p231 = pneg %p108
        $region42: #{tpu_custom_call.1} parent=31 // pred_check_branch
          %233 = sbr.rel (%p231) target = $region44
        $region43: #{tpu_custom_call.1} parent=31 // pred_region
          %234 = dma.done [#allocation6], 2048
        $region44: #{tpu_custom_call.1} parent=31 // pred_fallthru
          _
        %s235 = sand.u32 %s43, 1
        %s236 = scalar_lea.sflag [#allocation3], %s235
        %s237 = sand.u32 %s43, 1
        %s238 = smul.addr %s237, 512
        %s239 = scalar_lea.vmem [#allocation2], %s238
        %p240 = pneg %p56
        %p241 = pneg %p53
        %p242 = pneg %p82
        %p243 = pneg %p79
        %p244 = pneg %p108
        %p245 = pneg %p105
        %p246 = pneg %p136
        %p247 = pneg %p133
        %s248 = sand.u32 %s123, 1
        %s249 = scalar_lea.sflag [#allocation4], %s248
        %s250 = sand.u32 %s123, 1
        %s251 = smul.addr %s250, 512
        %s252 = scalar_lea.vmem [#allocation8], %s251
        %s253 = smul.u32 4, %s26
        %s254 = smul.u32 16, %s25
        %s255 = smul.u32 16, %s25
        %s256 = smul.u32 16, %s25
        %s257 = smul.u32 4, %s26
        %s258 = smul.u32 16, %s25
        %v259 = vld [vmem:[%s222] sm:$0xff]
        %v260 = vld [vmem:[%s222 + $0x8] sm:$0xff]
        %v261 = vld [vmem:[%s222 + $0x10] sm:$0xff]
        %v262 = vld [vmem:[%s222 + $0x18] sm:$0xff]
        %v263 = vld [vmem:[%s222 + $0x20] sm:$0xff]
        %v264 = vld [vmem:[%s222 + $0x28] sm:$0xff]
        %v265 = vld [vmem:[%s222 + $0x30] sm:$0xff]
        %v266 = vld [vmem:[%s222 + $0x38] sm:$0xff]
        %v267 = vld [vmem:[%s222 + $0x40] sm:$0xff]
        %v268 = vld [vmem:[%s222 + $0x48] sm:$0xff]
        %v269 = vld [vmem:[%s222 + $0x50] sm:$0xff]
        %v270 = vld [vmem:[%s222 + $0x58] sm:$0xff]
        %v271 = vld [vmem:[%s222 + $0x60] sm:$0xff]
        %v272 = vld [vmem:[%s222 + $0x68] sm:$0xff]
        %v273 = vld [vmem:[%s222 + $0x70] sm:$0xff]
        %v274 = vld [vmem:[%s222 + $0x78] sm:$0xff]
        %v275 = vld [vmem:[%s222 + $0x80] sm:$0xff]
        %v276 = vld [vmem:[%s222 + $0x88] sm:$0xff]
        %v277 = vld [vmem:[%s222 + $0x90] sm:$0xff]
        %v278 = vld [vmem:[%s222 + $0x98] sm:$0xff]
        %v279 = vld [vmem:[%s222 + $0xa0] sm:$0xff]
        %v280 = vld [vmem:[%s222 + $0xa8] sm:$0xff]
        %v281 = vld [vmem:[%s222 + $0xb0] sm:$0xff]
        %v282 = vld [vmem:[%s222 + $0xb8] sm:$0xff]
        %v283 = vld [vmem:[%s222 + $0xc0] sm:$0xff]
        %v284 = vld [vmem:[%s222 + $0xc8] sm:$0xff]
        %v285 = vld [vmem:[%s222 + $0xd0] sm:$0xff]
        %v286 = vld [vmem:[%s222 + $0xd8] sm:$0xff]
        %v287 = vld [vmem:[%s222 + $0xe0] sm:$0xff]
        %v288 = vld [vmem:[%s222 + $0xe8] sm:$0xff]
        %v289 = vld [vmem:[%s222 + $0xf0] sm:$0xff]
        %v290 = vld [vmem:[%s222 + $0xf8] sm:$0xff]
        %v291 = vld [vmem:[%s222 + $0x100] sm:$0xff]
        %v292 = vld [vmem:[%s222 + $0x108] sm:$0xff]
        %v293 = vld [vmem:[%s222 + $0x110] sm:$0xff]
        %v294 = vld [vmem:[%s222 + $0x118] sm:$0xff]
        %v295 = vld [vmem:[%s222 + $0x120] sm:$0xff]
        %v296 = vld [vmem:[%s222 + $0x128] sm:$0xff]
        %v297 = vld [vmem:[%s222 + $0x130] sm:$0xff]
        %v298 = vld [vmem:[%s222 + $0x138] sm:$0xff]
        %v299 = vld [vmem:[%s222 + $0x140] sm:$0xff]
        %v300 = vld [vmem:[%s222 + $0x148] sm:$0xff]
        %v301 = vld [vmem:[%s222 + $0x150] sm:$0xff]
        %v302 = vld [vmem:[%s222 + $0x158] sm:$0xff]
        %v303 = vld [vmem:[%s222 + $0x160] sm:$0xff]
        %v304 = vld [vmem:[%s222 + $0x168] sm:$0xff]
        %v305 = vld [vmem:[%s222 + $0x170] sm:$0xff]
        %v306 = vld [vmem:[%s222 + $0x178] sm:$0xff]
        %v307 = vld [vmem:[%s222 + $0x180] sm:$0xff]
        %v308 = vld [vmem:[%s222 + $0x188] sm:$0xff]
        %v309 = vld [vmem:[%s222 + $0x190] sm:$0xff]
        %v310 = vld [vmem:[%s222 + $0x198] sm:$0xff]
        %v311 = vld [vmem:[%s222 + $0x1a0] sm:$0xff]
        %v312 = vld [vmem:[%s222 + $0x1a8] sm:$0xff]
        %v313 = vld [vmem:[%s222 + $0x1b0] sm:$0xff]
        %v314 = vld [vmem:[%s222 + $0x1b8] sm:$0xff]
        %v315 = vld [vmem:[%s222 + $0x1c0] sm:$0xff]
        %v316 = vld [vmem:[%s222 + $0x1c8] sm:$0xff]
        %v317 = vld [vmem:[%s222 + $0x1d0] sm:$0xff]
        %v318 = vld [vmem:[%s222 + $0x1d8] sm:$0xff]
        %v319 = vld [vmem:[%s222 + $0x1e0] sm:$0xff]
        %v320 = vld [vmem:[%s222 + $0x1e8] sm:$0xff]
        %v321 = vld [vmem:[%s222 + $0x1f0] sm:$0xff]
        %v322 = vld [vmem:[%s222 + $0x1f8] sm:$0xff]
        %v323 = vsub.f32 0.0, %v259
        %v324 = vsub.f32 0.0, %v260
        %v325 = vsub.f32 0.0, %v261
        %v326 = vsub.f32 0.0, %v262
        %v327 = vsub.f32 0.0, %v263
        %v328 = vsub.f32 0.0, %v264
        %v329 = vsub.f32 0.0, %v265
        %v330 = vsub.f32 0.0, %v266
        %v331 = vsub.f32 0.0, %v267
        %v332 = vsub.f32 0.0, %v268
        %v333 = vsub.f32 0.0, %v269
        %v334 = vsub.f32 0.0, %v270
        %v335 = vsub.f32 0.0, %v271
        %v336 = vsub.f32 0.0, %v272
        %v337 = vsub.f32 0.0, %v273
        %v338 = vsub.f32 0.0, %v274
        %v339 = vsub.f32 0.0, %v275
        %v340 = vsub.f32 0.0, %v276
        %v341 = vsub.f32 0.0, %v277
        %v342 = vsub.f32 0.0, %v278
        %v343 = vsub.f32 0.0, %v279
        %v344 = vsub.f32 0.0, %v280
        %v345 = vsub.f32 0.0, %v281
        %v346 = vsub.f32 0.0, %v282
        %v347 = vsub.f32 0.0, %v283
        %v348 = vsub.f32 0.0, %v284
        %v349 = vsub.f32 0.0, %v285
        %v350 = vsub.f32 0.0, %v286
        %v351 = vsub.f32 0.0, %v287
        %v352 = vsub.f32 0.0, %v288
        %v353 = vsub.f32 0.0, %v289
        %v354 = vsub.f32 0.0, %v290
        %v355 = vsub.f32 0.0, %v291
        %v356 = vsub.f32 0.0, %v292
        %v357 = vsub.f32 0.0, %v293
        %v358 = vsub.f32 0.0, %v294
        %v359 = vsub.f32 0.0, %v295
        %v360 = vsub.f32 0.0, %v296
        %v361 = vsub.f32 0.0, %v297
        %v362 = vsub.f32 0.0, %v298
        %v363 = vsub.f32 0.0, %v299
        %v364 = vsub.f32 0.0, %v300
        %v365 = vsub.f32 0.0, %v301
        %v366 = vsub.f32 0.0, %v302
        %v367 = vsub.f32 0.0, %v303
        %v368 = vsub.f32 0.0, %v304
        %v369 = vsub.f32 0.0, %v305
        %v370 = vsub.f32 0.0, %v306
        %v371 = vsub.f32 0.0, %v307
        %v372 = vsub.f32 0.0, %v308
        %v373 = vsub.f32 0.0, %v309
        %v374 = vsub.f32 0.0, %v310
        %v375 = vsub.f32 0.0, %v311
        %v376 = vsub.f32 0.0, %v312
        %v377 = vsub.f32 0.0, %v313
        %v378 = vsub.f32 0.0, %v314
        %v379 = vsub.f32 0.0, %v315
        %v380 = vsub.f32 0.0, %v316
        %v381 = vsub.f32 0.0, %v317
        %v382 = vsub.f32 0.0, %v318
        %v383 = vsub.f32 0.0, %v319
        %v384 = vsub.f32 0.0, %v320
        %v385 = vsub.f32 0.0, %v321
        %v386 = vsub.f32 0.0, %v322
        %451 = vrot.lane.b32.xlu0 %v323, 64
        %v452 = vpop.permute.xlu0 %451
        %453 = vrot.lane.b32.xlu0 %v324, 64
        %v454 = vpop.permute.xlu0 %453
        %455 = vrot.lane.b32.xlu0 %v325, 64
        %v456 = vpop.permute.xlu0 %455
        %457 = vrot.lane.b32.xlu0 %v326, 64
        %v458 = vpop.permute.xlu0 %457
        %459 = vrot.lane.b32.xlu0 %v327, 64
        %v460 = vpop.permute.xlu0 %459
        %461 = vrot.lane.b32.xlu0 %v328, 64
        %v462 = vpop.permute.xlu0 %461
        %463 = vrot.lane.b32.xlu0 %v329, 64
        %v464 = vpop.permute.xlu0 %463
        %465 = vrot.lane.b32.xlu0 %v330, 64
        %v466 = vpop.permute.xlu0 %465
        %467 = vrot.lane.b32.xlu0 %v331, 64
        %v468 = vpop.permute.xlu0 %467
        %469 = vrot.lane.b32.xlu0 %v332, 64
        %v470 = vpop.permute.xlu0 %469
        %471 = vrot.lane.b32.xlu0 %v333, 64
        %v472 = vpop.permute.xlu0 %471
        %473 = vrot.lane.b32.xlu0 %v334, 64
        %v474 = vpop.permute.xlu0 %473
        %475 = vrot.lane.b32.xlu0 %v335, 64
        %v476 = vpop.permute.xlu0 %475
        %477 = vrot.lane.b32.xlu0 %v336, 64
        %v478 = vpop.permute.xlu0 %477
        %479 = vrot.lane.b32.xlu0 %v337, 64
        %v480 = vpop.permute.xlu0 %479
        %481 = vrot.lane.b32.xlu0 %v338, 64
        %v482 = vpop.permute.xlu0 %481
        %483 = vrot.lane.b32.xlu0 %v339, 64
        %v484 = vpop.permute.xlu0 %483
        %485 = vrot.lane.b32.xlu0 %v340, 64
        %v486 = vpop.permute.xlu0 %485
        %487 = vrot.lane.b32.xlu0 %v341, 64
        %v488 = vpop.permute.xlu0 %487
        %489 = vrot.lane.b32.xlu0 %v342, 64
        %v490 = vpop.permute.xlu0 %489
        %491 = vrot.lane.b32.xlu0 %v343, 64
        %v492 = vpop.permute.xlu0 %491
        %493 = vrot.lane.b32.xlu0 %v344, 64
        %v494 = vpop.permute.xlu0 %493
        %495 = vrot.lane.b32.xlu0 %v345, 64
        %v496 = vpop.permute.xlu0 %495
        %497 = vrot.lane.b32.xlu0 %v346, 64
        %v498 = vpop.permute.xlu0 %497
        %499 = vrot.lane.b32.xlu0 %v347, 64
        %v500 = vpop.permute.xlu0 %499
        %501 = vrot.lane.b32.xlu0 %v348, 64
        %v502 = vpop.permute.xlu0 %501
        %503 = vrot.lane.b32.xlu0 %v349, 64
        %v504 = vpop.permute.xlu0 %503
        %505 = vrot.lane.b32.xlu0 %v350, 64
        %v506 = vpop.permute.xlu0 %505
        %507 = vrot.lane.b32.xlu0 %v351, 64
        %v508 = vpop.permute.xlu0 %507
        %509 = vrot.lane.b32.xlu0 %v352, 64
        %v510 = vpop.permute.xlu0 %509
        %511 = vrot.lane.b32.xlu0 %v353, 64
        %v512 = vpop.permute.xlu0 %511
        %513 = vrot.lane.b32.xlu0 %v354, 64
        %v514 = vpop.permute.xlu0 %513
        %515 = vrot.lane.b32.xlu0 %v355, 64
        %v516 = vpop.permute.xlu0 %515
        %517 = vrot.lane.b32.xlu0 %v356, 64
        %v518 = vpop.permute.xlu0 %517
        %519 = vrot.lane.b32.xlu0 %v357, 64
        %v520 = vpop.permute.xlu0 %519
        %521 = vrot.lane.b32.xlu0 %v358, 64
        %v522 = vpop.permute.xlu0 %521
        %523 = vrot.lane.b32.xlu0 %v359, 64
        %v524 = vpop.permute.xlu0 %523
        %525 = vrot.lane.b32.xlu0 %v360, 64
        %v526 = vpop.permute.xlu0 %525
        %527 = vrot.lane.b32.xlu0 %v361, 64
        %v528 = vpop.permute.xlu0 %527
        %529 = vrot.lane.b32.xlu0 %v362, 64
        %v530 = vpop.permute.xlu0 %529
        %531 = vrot.lane.b32.xlu0 %v363, 64
        %v532 = vpop.permute.xlu0 %531
        %533 = vrot.lane.b32.xlu0 %v364, 64
        %v534 = vpop.permute.xlu0 %533
        %535 = vrot.lane.b32.xlu0 %v365, 64
        %v536 = vpop.permute.xlu0 %535
        %537 = vrot.lane.b32.xlu0 %v366, 64
        %v538 = vpop.permute.xlu0 %537
        %539 = vrot.lane.b32.xlu0 %v367, 64
        %v540 = vpop.permute.xlu0 %539
        %541 = vrot.lane.b32.xlu0 %v368, 64
        %v542 = vpop.permute.xlu0 %541
        %543 = vrot.lane.b32.xlu0 %v369, 64
        %v544 = vpop.permute.xlu0 %543
        %545 = vrot.lane.b32.xlu0 %v370, 64
        %v546 = vpop.permute.xlu0 %545
        %547 = vrot.lane.b32.xlu0 %v371, 64
        %v548 = vpop.permute.xlu0 %547
        %549 = vrot.lane.b32.xlu0 %v372, 64
        %v550 = vpop.permute.xlu0 %549
        %551 = vrot.lane.b32.xlu0 %v373, 64
        %v552 = vpop.permute.xlu0 %551
        %553 = vrot.lane.b32.xlu0 %v374, 64
        %v554 = vpop.permute.xlu0 %553
        %555 = vrot.lane.b32.xlu0 %v375, 64
        %v556 = vpop.permute.xlu0 %555
        %557 = vrot.lane.b32.xlu0 %v376, 64
        %v558 = vpop.permute.xlu0 %557
        %559 = vrot.lane.b32.xlu0 %v377, 64
        %v560 = vpop.permute.xlu0 %559
        %561 = vrot.lane.b32.xlu0 %v378, 64
        %v562 = vpop.permute.xlu0 %561
        %563 = vrot.lane.b32.xlu0 %v379, 64
        %v564 = vpop.permute.xlu0 %563
        %565 = vrot.lane.b32.xlu0 %v380, 64
        %v566 = vpop.permute.xlu0 %565
        %567 = vrot.lane.b32.xlu0 %v381, 64
        %v568 = vpop.permute.xlu0 %567
        %569 = vrot.lane.b32.xlu0 %v382, 64
        %v570 = vpop.permute.xlu0 %569
        %571 = vrot.lane.b32.xlu0 %v383, 64
        %v572 = vpop.permute.xlu0 %571
        %573 = vrot.lane.b32.xlu0 %v384, 64
        %v574 = vpop.permute.xlu0 %573
        %575 = vrot.lane.b32.xlu0 %v385, 64
        %v576 = vpop.permute.xlu0 %575
        %577 = vrot.lane.b32.xlu0 %v386, 64
        %v578 = vpop.permute.xlu0 %577
        %707 = vrot.lane.b32.xlu0 %v259, 64
        %v708 = vpop.permute.xlu0 %707
        %709 = vrot.lane.b32.xlu0 %v260, 64
        %v710 = vpop.permute.xlu0 %709
        %711 = vrot.lane.b32.xlu0 %v261, 64
        %v712 = vpop.permute.xlu0 %711
        %713 = vrot.lane.b32.xlu0 %v262, 64
        %v714 = vpop.permute.xlu0 %713
        %715 = vrot.lane.b32.xlu0 %v263, 64
        %v716 = vpop.permute.xlu0 %715
        %717 = vrot.lane.b32.xlu0 %v264, 64
        %v718 = vpop.permute.xlu0 %717
        %719 = vrot.lane.b32.xlu0 %v265, 64
        %v720 = vpop.permute.xlu0 %719
        %721 = vrot.lane.b32.xlu0 %v266, 64
        %v722 = vpop.permute.xlu0 %721
        %723 = vrot.lane.b32.xlu0 %v267, 64
        %v724 = vpop.permute.xlu0 %723
        %725 = vrot.lane.b32.xlu0 %v268, 64
        %v726 = vpop.permute.xlu0 %725
        %727 = vrot.lane.b32.xlu0 %v269, 64
        %v728 = vpop.permute.xlu0 %727
        %729 = vrot.lane.b32.xlu0 %v270, 64
        %v730 = vpop.permute.xlu0 %729
        %731 = vrot.lane.b32.xlu0 %v271, 64
        %v732 = vpop.permute.xlu0 %731
        %733 = vrot.lane.b32.xlu0 %v272, 64
        %v734 = vpop.permute.xlu0 %733
        %735 = vrot.lane.b32.xlu0 %v273, 64
        %v736 = vpop.permute.xlu0 %735
        %737 = vrot.lane.b32.xlu0 %v274, 64
        %v738 = vpop.permute.xlu0 %737
        %739 = vrot.lane.b32.xlu0 %v275, 64
        %v740 = vpop.permute.xlu0 %739
        %741 = vrot.lane.b32.xlu0 %v276, 64
        %v742 = vpop.permute.xlu0 %741
        %743 = vrot.lane.b32.xlu0 %v277, 64
        %v744 = vpop.permute.xlu0 %743
        %745 = vrot.lane.b32.xlu0 %v278, 64
        %v746 = vpop.permute.xlu0 %745
        %747 = vrot.lane.b32.xlu0 %v279, 64
        %v748 = vpop.permute.xlu0 %747
        %749 = vrot.lane.b32.xlu0 %v280, 64
        %v750 = vpop.permute.xlu0 %749
        %751 = vrot.lane.b32.xlu0 %v281, 64
        %v752 = vpop.permute.xlu0 %751
        %753 = vrot.lane.b32.xlu0 %v282, 64
        %v754 = vpop.permute.xlu0 %753
        %755 = vrot.lane.b32.xlu0 %v283, 64
        %v756 = vpop.permute.xlu0 %755
        %757 = vrot.lane.b32.xlu0 %v284, 64
        %v758 = vpop.permute.xlu0 %757
        %759 = vrot.lane.b32.xlu0 %v285, 64
        %v760 = vpop.permute.xlu0 %759
        %761 = vrot.lane.b32.xlu0 %v286, 64
        %v762 = vpop.permute.xlu0 %761
        %763 = vrot.lane.b32.xlu0 %v287, 64
        %v764 = vpop.permute.xlu0 %763
        %765 = vrot.lane.b32.xlu0 %v288, 64
        %v766 = vpop.permute.xlu0 %765
        %767 = vrot.lane.b32.xlu0 %v289, 64
        %v768 = vpop.permute.xlu0 %767
        %769 = vrot.lane.b32.xlu0 %v290, 64
        %v770 = vpop.permute.xlu0 %769
        %771 = vrot.lane.b32.xlu0 %v291, 64
        %v772 = vpop.permute.xlu0 %771
        %773 = vrot.lane.b32.xlu0 %v292, 64
        %v774 = vpop.permute.xlu0 %773
        %775 = vrot.lane.b32.xlu0 %v293, 64
        %v776 = vpop.permute.xlu0 %775
        %777 = vrot.lane.b32.xlu0 %v294, 64
        %v778 = vpop.permute.xlu0 %777
        %779 = vrot.lane.b32.xlu0 %v295, 64
        %v780 = vpop.permute.xlu0 %779
        %781 = vrot.lane.b32.xlu0 %v296, 64
        %v782 = vpop.permute.xlu0 %781
        %783 = vrot.lane.b32.xlu0 %v297, 64
        %v784 = vpop.permute.xlu0 %783
        %785 = vrot.lane.b32.xlu0 %v298, 64
        %v786 = vpop.permute.xlu0 %785
        %787 = vrot.lane.b32.xlu0 %v299, 64
        %v788 = vpop.permute.xlu0 %787
        %789 = vrot.lane.b32.xlu0 %v300, 64
        %v790 = vpop.permute.xlu0 %789
        %791 = vrot.lane.b32.xlu0 %v301, 64
        %v792 = vpop.permute.xlu0 %791
        %793 = vrot.lane.b32.xlu0 %v302, 64
        %v794 = vpop.permute.xlu0 %793
        %795 = vrot.lane.b32.xlu0 %v303, 64
        %v796 = vpop.permute.xlu0 %795
        %797 = vrot.lane.b32.xlu0 %v304, 64
        %v798 = vpop.permute.xlu0 %797
        %799 = vrot.lane.b32.xlu0 %v305, 64
        %v800 = vpop.permute.xlu0 %799
        %801 = vrot.lane.b32.xlu0 %v306, 64
        %v802 = vpop.permute.xlu0 %801
        %803 = vrot.lane.b32.xlu0 %v307, 64
        %v804 = vpop.permute.xlu0 %803
        %805 = vrot.lane.b32.xlu0 %v308, 64
        %v806 = vpop.permute.xlu0 %805
        %807 = vrot.lane.b32.xlu0 %v309, 64
        %v808 = vpop.permute.xlu0 %807
        %809 = vrot.lane.b32.xlu0 %v310, 64
        %v810 = vpop.permute.xlu0 %809
        %811 = vrot.lane.b32.xlu0 %v311, 64
        %v812 = vpop.permute.xlu0 %811
        %813 = vrot.lane.b32.xlu0 %v312, 64
        %v814 = vpop.permute.xlu0 %813
        %815 = vrot.lane.b32.xlu0 %v313, 64
        %v816 = vpop.permute.xlu0 %815
        %817 = vrot.lane.b32.xlu0 %v314, 64
        %v818 = vpop.permute.xlu0 %817
        %819 = vrot.lane.b32.xlu0 %v315, 64
        %v820 = vpop.permute.xlu0 %819
        %821 = vrot.lane.b32.xlu0 %v316, 64
        %v822 = vpop.permute.xlu0 %821
        %823 = vrot.lane.b32.xlu0 %v317, 64
        %v824 = vpop.permute.xlu0 %823
        %825 = vrot.lane.b32.xlu0 %v318, 64
        %v826 = vpop.permute.xlu0 %825
        %827 = vrot.lane.b32.xlu0 %v319, 64
        %v828 = vpop.permute.xlu0 %827
        %829 = vrot.lane.b32.xlu0 %v320, 64
        %v830 = vpop.permute.xlu0 %829
        %831 = vrot.lane.b32.xlu0 %v321, 64
        %v832 = vpop.permute.xlu0 %831
        %833 = vrot.lane.b32.xlu0 %v322, 64
        %v834 = vpop.permute.xlu0 %833
        %vm899 = vcmask 523264
        %v900 = vsel %vm899, %v452, %v708
        %v901 = vsel %vm899, %v454, %v710
        %v902 = vsel %vm899, %v456, %v712
        %v903 = vsel %vm899, %v458, %v714
        %v904 = vsel %vm899, %v460, %v716
        %v905 = vsel %vm899, %v462, %v718
        %v906 = vsel %vm899, %v464, %v720
        %v907 = vsel %vm899, %v466, %v722
        %v908 = vsel %vm899, %v468, %v724
        %v909 = vsel %vm899, %v470, %v726
        %v910 = vsel %vm899, %v472, %v728
        %v911 = vsel %vm899, %v474, %v730
        %v912 = vsel %vm899, %v476, %v732
        %v913 = vsel %vm899, %v478, %v734
        %v914 = vsel %vm899, %v480, %v736
        %v915 = vsel %vm899, %v482, %v738
        %v916 = vsel %vm899, %v484, %v740
        %v917 = vsel %vm899, %v486, %v742
        %v918 = vsel %vm899, %v488, %v744
        %v919 = vsel %vm899, %v490, %v746
        %v920 = vsel %vm899, %v492, %v748
        %v921 = vsel %vm899, %v494, %v750
        %v922 = vsel %vm899, %v496, %v752
        %v923 = vsel %vm899, %v498, %v754
        %v924 = vsel %vm899, %v500, %v756
        %v925 = vsel %vm899, %v502, %v758
        %v926 = vsel %vm899, %v504, %v760
        %v927 = vsel %vm899, %v506, %v762
        %v928 = vsel %vm899, %v508, %v764
        %v929 = vsel %vm899, %v510, %v766
        %v930 = vsel %vm899, %v512, %v768
        %v931 = vsel %vm899, %v514, %v770
        %v932 = vsel %vm899, %v516, %v772
        %v933 = vsel %vm899, %v518, %v774
        %v934 = vsel %vm899, %v520, %v776
        %v935 = vsel %vm899, %v522, %v778
        %v936 = vsel %vm899, %v524, %v780
        %v937 = vsel %vm899, %v526, %v782
        %v938 = vsel %vm899, %v528, %v784
        %v939 = vsel %vm899, %v530, %v786
        %v940 = vsel %vm899, %v532, %v788
        %v941 = vsel %vm899, %v534, %v790
        %v942 = vsel %vm899, %v536, %v792
        %v943 = vsel %vm899, %v538, %v794
        %v944 = vsel %vm899, %v540, %v796
        %v945 = vsel %vm899, %v542, %v798
        %v946 = vsel %vm899, %v544, %v800
        %v947 = vsel %vm899, %v546, %v802
        %v948 = vsel %vm899, %v548, %v804
        %v949 = vsel %vm899, %v550, %v806
        %v950 = vsel %vm899, %v552, %v808
        %v951 = vsel %vm899, %v554, %v810
        %v952 = vsel %vm899, %v556, %v812
        %v953 = vsel %vm899, %v558, %v814
        %v954 = vsel %vm899, %v560, %v816
        %v955 = vsel %vm899, %v562, %v818
        %v956 = vsel %vm899, %v564, %v820
        %v957 = vsel %vm899, %v566, %v822
        %v958 = vsel %vm899, %v568, %v824
        %v959 = vsel %vm899, %v570, %v826
        %v960 = vsel %vm899, %v572, %v828
        %v961 = vsel %vm899, %v574, %v830
        %v962 = vsel %vm899, %v576, %v832
        %v963 = vsel %vm899, %v578, %v834
        %v964 = vld [vmem:[#allocation7] sm:$0xff]
        %v965 = vld [vmem:[#allocation7 + $0x8] sm:$0xff]
        %v966 = vld [vmem:[#allocation7 + $0x10] sm:$0xff]
        %v967 = vld [vmem:[#allocation7 + $0x18] sm:$0xff]
        %v968 = vld [vmem:[#allocation7 + $0x20] sm:$0xff]
        %v969 = vld [vmem:[#allocation7 + $0x28] sm:$0xff]
        %v970 = vld [vmem:[#allocation7 + $0x30] sm:$0xff]
        %v971 = vld [vmem:[#allocation7 + $0x38] sm:$0xff]
        %v972 = vld [vmem:[#allocation7 + $0x40] sm:$0xff]
        %v973 = vld [vmem:[#allocation7 + $0x48] sm:$0xff]
        %v974 = vld [vmem:[#allocation7 + $0x50] sm:$0xff]
        %v975 = vld [vmem:[#allocation7 + $0x58] sm:$0xff]
        %v976 = vld [vmem:[#allocation7 + $0x60] sm:$0xff]
        %v977 = vld [vmem:[#allocation7 + $0x68] sm:$0xff]
        %v978 = vld [vmem:[#allocation7 + $0x70] sm:$0xff]
        %v979 = vld [vmem:[#allocation7 + $0x78] sm:$0xff]
        %v980 = vmul.f32 %v259, %v964
        %v981 = vmul.f32 %v260, %v965
        %v982 = vmul.f32 %v261, %v966
        %v983 = vmul.f32 %v262, %v967
        %v984 = vmul.f32 %v263, %v968
        %v985 = vmul.f32 %v264, %v969
        %v986 = vmul.f32 %v265, %v970
        %v987 = vmul.f32 %v266, %v971
        %v988 = vmul.f32 %v267, %v972
        %v989 = vmul.f32 %v268, %v973
        %v990 = vmul.f32 %v269, %v974
        %v991 = vmul.f32 %v270, %v975
        %v992 = vmul.f32 %v271, %v976
        %v993 = vmul.f32 %v272, %v977
        %v994 = vmul.f32 %v273, %v978
        %v995 = vmul.f32 %v274, %v979
        %v996 = vmul.f32 %v275, %v964
        %v997 = vmul.f32 %v276, %v965
        %v998 = vmul.f32 %v277, %v966
        %v999 = vmul.f32 %v278, %v967
        %v1000 = vmul.f32 %v279, %v968
        %v1001 = vmul.f32 %v280, %v969
        %v1002 = vmul.f32 %v281, %v970
        %v1003 = vmul.f32 %v282, %v971
        %v1004 = vmul.f32 %v283, %v972
        %v1005 = vmul.f32 %v284, %v973
        %v1006 = vmul.f32 %v285, %v974
        %v1007 = vmul.f32 %v286, %v975
        %v1008 = vmul.f32 %v287, %v976
        %v1009 = vmul.f32 %v288, %v977
        %v1010 = vmul.f32 %v289, %v978
        %v1011 = vmul.f32 %v290, %v979
        %v1012 = vmul.f32 %v291, %v964
        %v1013 = vmul.f32 %v292, %v965
        %v1014 = vmul.f32 %v293, %v966
        %v1015 = vmul.f32 %v294, %v967
        %v1016 = vmul.f32 %v295, %v968
        %v1017 = vmul.f32 %v296, %v969
        %v1018 = vmul.f32 %v297, %v970
        %v1019 = vmul.f32 %v298, %v971
        %v1020 = vmul.f32 %v299, %v972
        %v1021 = vmul.f32 %v300, %v973
        %v1022 = vmul.f32 %v301, %v974
        %v1023 = vmul.f32 %v302, %v975
        %v1024 = vmul.f32 %v303, %v976
        %v1025 = vmul.f32 %v304, %v977
        %v1026 = vmul.f32 %v305, %v978
        %v1027 = vmul.f32 %v306, %v979
        %v1028 = vmul.f32 %v307, %v964
        %v1029 = vmul.f32 %v308, %v965
        %v1030 = vmul.f32 %v309, %v966
        %v1031 = vmul.f32 %v310, %v967
        %v1032 = vmul.f32 %v311, %v968
        %v1033 = vmul.f32 %v312, %v969
        %v1034 = vmul.f32 %v313, %v970
        %v1035 = vmul.f32 %v314, %v971
        %v1036 = vmul.f32 %v315, %v972
        %v1037 = vmul.f32 %v316, %v973
        %v1038 = vmul.f32 %v317, %v974
        %v1039 = vmul.f32 %v318, %v975
        %v1040 = vmul.f32 %v319, %v976
        %v1041 = vmul.f32 %v320, %v977
        %v1042 = vmul.f32 %v321, %v978
        %v1043 = vmul.f32 %v322, %v979
        %v1044 = vld [vmem:[#allocation5] sm:$0xff]
        %v1045 = vld [vmem:[#allocation5 + $0x8] sm:$0xff]
        %v1046 = vld [vmem:[#allocation5 + $0x10] sm:$0xff]
        %v1047 = vld [vmem:[#allocation5 + $0x18] sm:$0xff]
        %v1048 = vld [vmem:[#allocation5 + $0x20] sm:$0xff]
        %v1049 = vld [vmem:[#allocation5 + $0x28] sm:$0xff]
        %v1050 = vld [vmem:[#allocation5 + $0x30] sm:$0xff]
        %v1051 = vld [vmem:[#allocation5 + $0x38] sm:$0xff]
        %v1052 = vld [vmem:[#allocation5 + $0x40] sm:$0xff]
        %v1053 = vld [vmem:[#allocation5 + $0x48] sm:$0xff]
        %v1054 = vld [vmem:[#allocation5 + $0x50] sm:$0xff]
        %v1055 = vld [vmem:[#allocation5 + $0x58] sm:$0xff]
        %v1056 = vld [vmem:[#allocation5 + $0x60] sm:$0xff]
        %v1057 = vld [vmem:[#allocation5 + $0x68] sm:$0xff]
        %v1058 = vld [vmem:[#allocation5 + $0x70] sm:$0xff]
        %v1059 = vld [vmem:[#allocation5 + $0x78] sm:$0xff]
        %v1060 = vmul.f32 %v900, %v1044
        %v1061 = vmul.f32 %v901, %v1045
        %v1062 = vmul.f32 %v902, %v1046
        %v1063 = vmul.f32 %v903, %v1047
        %v1064 = vmul.f32 %v904, %v1048
        %v1065 = vmul.f32 %v905, %v1049
        %v1066 = vmul.f32 %v906, %v1050
        %v1067 = vmul.f32 %v907, %v1051
        %v1068 = vmul.f32 %v908, %v1052
        %v1069 = vmul.f32 %v909, %v1053
        %v1070 = vmul.f32 %v910, %v1054
        %v1071 = vmul.f32 %v911, %v1055
        %v1072 = vmul.f32 %v912, %v1056
        %v1073 = vmul.f32 %v913, %v1057
        %v1074 = vmul.f32 %v914, %v1058
        %v1075 = vmul.f32 %v915, %v1059
        %v1076 = vmul.f32 %v916, %v1044
        %v1077 = vmul.f32 %v917, %v1045
        %v1078 = vmul.f32 %v918, %v1046
        %v1079 = vmul.f32 %v919, %v1047
        %v1080 = vmul.f32 %v920, %v1048
        %v1081 = vmul.f32 %v921, %v1049
        %v1082 = vmul.f32 %v922, %v1050
        %v1083 = vmul.f32 %v923, %v1051
        %v1084 = vmul.f32 %v924, %v1052
        %v1085 = vmul.f32 %v925, %v1053
        %v1086 = vmul.f32 %v926, %v1054
        %v1087 = vmul.f32 %v927, %v1055
        %v1088 = vmul.f32 %v928, %v1056
        %v1089 = vmul.f32 %v929, %v1057
        %v1090 = vmul.f32 %v930, %v1058
        %v1091 = vmul.f32 %v931, %v1059
        %v1092 = vmul.f32 %v932, %v1044
        %v1093 = vmul.f32 %v933, %v1045
        %v1094 = vmul.f32 %v934, %v1046
        %v1095 = vmul.f32 %v935, %v1047
        %v1096 = vmul.f32 %v936, %v1048
        %v1097 = vmul.f32 %v937, %v1049
        %v1098 = vmul.f32 %v938, %v1050
        %v1099 = vmul.f32 %v939, %v1051
        %v1100 = vmul.f32 %v940, %v1052
        %v1101 = vmul.f32 %v941, %v1053
        %v1102 = vmul.f32 %v942, %v1054
        %v1103 = vmul.f32 %v943, %v1055
        %v1104 = vmul.f32 %v944, %v1056
        %v1105 = vmul.f32 %v945, %v1057
        %v1106 = vmul.f32 %v946, %v1058
        %v1107 = vmul.f32 %v947, %v1059
        %v1108 = vmul.f32 %v948, %v1044
        %v1109 = vmul.f32 %v949, %v1045
        %v1110 = vmul.f32 %v950, %v1046
        %v1111 = vmul.f32 %v951, %v1047
        %v1112 = vmul.f32 %v952, %v1048
        %v1113 = vmul.f32 %v953, %v1049
        %v1114 = vmul.f32 %v954, %v1050
        %v1115 = vmul.f32 %v955, %v1051
        %v1116 = vmul.f32 %v956, %v1052
        %v1117 = vmul.f32 %v957, %v1053
        %v1118 = vmul.f32 %v958, %v1054
        %v1119 = vmul.f32 %v959, %v1055
        %v1120 = vmul.f32 %v960, %v1056
        %v1121 = vmul.f32 %v961, %v1057
        %v1122 = vmul.f32 %v962, %v1058
        %v1123 = vmul.f32 %v963, %v1059
        %v1124 = vadd.f32 %v980, %v1060
        %v1125 = vadd.f32 %v981, %v1061
        %v1126 = vadd.f32 %v982, %v1062
        %v1127 = vadd.f32 %v983, %v1063
        %v1128 = vadd.f32 %v984, %v1064
        %v1129 = vadd.f32 %v985, %v1065
        %v1130 = vadd.f32 %v986, %v1066
        %v1131 = vadd.f32 %v987, %v1067
        %v1132 = vadd.f32 %v988, %v1068
        %v1133 = vadd.f32 %v989, %v1069
        %v1134 = vadd.f32 %v990, %v1070
        %v1135 = vadd.f32 %v991, %v1071
        %v1136 = vadd.f32 %v992, %v1072
        %v1137 = vadd.f32 %v993, %v1073
        %v1138 = vadd.f32 %v994, %v1074
        %v1139 = vadd.f32 %v995, %v1075
        %v1140 = vadd.f32 %v996, %v1076
        %v1141 = vadd.f32 %v997, %v1077
        %v1142 = vadd.f32 %v998, %v1078
        %v1143 = vadd.f32 %v999, %v1079
        %v1144 = vadd.f32 %v1000, %v1080
        %v1145 = vadd.f32 %v1001, %v1081
        %v1146 = vadd.f32 %v1002, %v1082
        %v1147 = vadd.f32 %v1003, %v1083
        %v1148 = vadd.f32 %v1004, %v1084
        %v1149 = vadd.f32 %v1005, %v1085
        %v1150 = vadd.f32 %v1006, %v1086
        %v1151 = vadd.f32 %v1007, %v1087
        %v1152 = vadd.f32 %v1008, %v1088
        %v1153 = vadd.f32 %v1009, %v1089
        %v1154 = vadd.f32 %v1010, %v1090
        %v1155 = vadd.f32 %v1011, %v1091
        %v1156 = vadd.f32 %v1012, %v1092
        %v1157 = vadd.f32 %v1013, %v1093
        %v1158 = vadd.f32 %v1014, %v1094
        %v1159 = vadd.f32 %v1015, %v1095
        %v1160 = vadd.f32 %v1016, %v1096
        %v1161 = vadd.f32 %v1017, %v1097
        %v1162 = vadd.f32 %v1018, %v1098
        %v1163 = vadd.f32 %v1019, %v1099
        %v1164 = vadd.f32 %v1020, %v1100
        %v1165 = vadd.f32 %v1021, %v1101
        %v1166 = vadd.f32 %v1022, %v1102
        %v1167 = vadd.f32 %v1023, %v1103
        %v1168 = vadd.f32 %v1024, %v1104
        %v1169 = vadd.f32 %v1025, %v1105
        %v1170 = vadd.f32 %v1026, %v1106
        %v1171 = vadd.f32 %v1027, %v1107
        %v1172 = vadd.f32 %v1028, %v1108
        %v1173 = vadd.f32 %v1029, %v1109
        %v1174 = vadd.f32 %v1030, %v1110
        %v1175 = vadd.f32 %v1031, %v1111
        %v1176 = vadd.f32 %v1032, %v1112
        %v1177 = vadd.f32 %v1033, %v1113
        %v1178 = vadd.f32 %v1034, %v1114
        %v1179 = vadd.f32 %v1035, %v1115
        %v1180 = vadd.f32 %v1036, %v1116
        %v1181 = vadd.f32 %v1037, %v1117
        %v1182 = vadd.f32 %v1038, %v1118
        %v1183 = vadd.f32 %v1039, %v1119
        %v1184 = vadd.f32 %v1040, %v1120
        %v1185 = vadd.f32 %v1041, %v1121
        %v1186 = vadd.f32 %v1042, %v1122
        %v1187 = vadd.f32 %v1043, %v1123
        %1188 = vst [vmem:[%s252] sm:$0xff] %v1124
        %1189 = vst [vmem:[%s252 + $0x8] sm:$0xff] %v1125
        %1190 = vst [vmem:[%s252 + $0x10] sm:$0xff] %v1126
        %1191 = vst [vmem:[%s252 + $0x18] sm:$0xff] %v1127
        %1192 = vst [vmem:[%s252 + $0x20] sm:$0xff] %v1128
        %1193 = vst [vmem:[%s252 + $0x28] sm:$0xff] %v1129
        %1194 = vst [vmem:[%s252 + $0x30] sm:$0xff] %v1130
        %1195 = vst [vmem:[%s252 + $0x38] sm:$0xff] %v1131
        %1196 = vst [vmem:[%s252 + $0x40] sm:$0xff] %v1132
        %1197 = vst [vmem:[%s252 + $0x48] sm:$0xff] %v1133
        %1198 = vst [vmem:[%s252 + $0x50] sm:$0xff] %v1134
        %1199 = vst [vmem:[%s252 + $0x58] sm:$0xff] %v1135
        %1200 = vst [vmem:[%s252 + $0x60] sm:$0xff] %v1136
        %1201 = vst [vmem:[%s252 + $0x68] sm:$0xff] %v1137
        %1202 = vst [vmem:[%s252 + $0x70] sm:$0xff] %v1138
        %1203 = vst [vmem:[%s252 + $0x78] sm:$0xff] %v1139
        %1204 = vst [vmem:[%s252 + $0x80] sm:$0xff] %v1140
        %1205 = vst [vmem:[%s252 + $0x88] sm:$0xff] %v1141
        %1206 = vst [vmem:[%s252 + $0x90] sm:$0xff] %v1142
        %1207 = vst [vmem:[%s252 + $0x98] sm:$0xff] %v1143
        %1208 = vst [vmem:[%s252 + $0xa0] sm:$0xff] %v1144
        %1209 = vst [vmem:[%s252 + $0xa8] sm:$0xff] %v1145
        %1210 = vst [vmem:[%s252 + $0xb0] sm:$0xff] %v1146
        %1211 = vst [vmem:[%s252 + $0xb8] sm:$0xff] %v1147
        %1212 = vst [vmem:[%s252 + $0xc0] sm:$0xff] %v1148
        %1213 = vst [vmem:[%s252 + $0xc8] sm:$0xff] %v1149
        %1214 = vst [vmem:[%s252 + $0xd0] sm:$0xff] %v1150
        %1215 = vst [vmem:[%s252 + $0xd8] sm:$0xff] %v1151
        %1216 = vst [vmem:[%s252 + $0xe0] sm:$0xff] %v1152
        %1217 = vst [vmem:[%s252 + $0xe8] sm:$0xff] %v1153
        %1218 = vst [vmem:[%s252 + $0xf0] sm:$0xff] %v1154
        %1219 = vst [vmem:[%s252 + $0xf8] sm:$0xff] %v1155
        %1220 = vst [vmem:[%s252 + $0x100] sm:$0xff] %v1156
        %1221 = vst [vmem:[%s252 + $0x108] sm:$0xff] %v1157
        %1222 = vst [vmem:[%s252 + $0x110] sm:$0xff] %v1158
        %1223 = vst [vmem:[%s252 + $0x118] sm:$0xff] %v1159
        %1224 = vst [vmem:[%s252 + $0x120] sm:$0xff] %v1160
        %1225 = vst [vmem:[%s252 + $0x128] sm:$0xff] %v1161
        %1226 = vst [vmem:[%s252 + $0x130] sm:$0xff] %v1162
        %1227 = vst [vmem:[%s252 + $0x138] sm:$0xff] %v1163
        %1228 = vst [vmem:[%s252 + $0x140] sm:$0xff] %v1164
        %1229 = vst [vmem:[%s252 + $0x148] sm:$0xff] %v1165
        %1230 = vst [vmem:[%s252 + $0x150] sm:$0xff] %v1166
        %1231 = vst [vmem:[%s252 + $0x158] sm:$0xff] %v1167
        %1232 = vst [vmem:[%s252 + $0x160] sm:$0xff] %v1168
        %1233 = vst [vmem:[%s252 + $0x168] sm:$0xff] %v1169
        %1234 = vst [vmem:[%s252 + $0x170] sm:$0xff] %v1170
        %1235 = vst [vmem:[%s252 + $0x178] sm:$0xff] %v1171
        %1236 = vst [vmem:[%s252 + $0x180] sm:$0xff] %v1172
        %1237 = vst [vmem:[%s252 + $0x188] sm:$0xff] %v1173
        %1238 = vst [vmem:[%s252 + $0x190] sm:$0xff] %v1174
        %1239 = vst [vmem:[%s252 + $0x198] sm:$0xff] %v1175
        %1240 = vst [vmem:[%s252 + $0x1a0] sm:$0xff] %v1176
        %1241 = vst [vmem:[%s252 + $0x1a8] sm:$0xff] %v1177
        %1242 = vst [vmem:[%s252 + $0x1b0] sm:$0xff] %v1178
        %1243 = vst [vmem:[%s252 + $0x1b8] sm:$0xff] %v1179
        %1244 = vst [vmem:[%s252 + $0x1c0] sm:$0xff] %v1180
        %1245 = vst [vmem:[%s252 + $0x1c8] sm:$0xff] %v1181
        %1246 = vst [vmem:[%s252 + $0x1d0] sm:$0xff] %v1182
        %1247 = vst [vmem:[%s252 + $0x1d8] sm:$0xff] %v1183
        %1248 = vst [vmem:[%s252 + $0x1e0] sm:$0xff] %v1184
        %1249 = vst [vmem:[%s252 + $0x1e8] sm:$0xff] %v1185
        %1250 = vst [vmem:[%s252 + $0x1f0] sm:$0xff] %v1186
        %1251 = vst [vmem:[%s252 + $0x1f8] sm:$0xff] %v1187
        %s1252 = sand.u32 %s123, 1
        %s1253 = scalar_lea.sflag [#allocation4], %s1252
        %s1254 = sand.u32 %s123, 1
        %s1255 = smul.addr %s1254, 512
        %s1256 = scalar_lea.vmem [#allocation8], %s1255
        // Predicated region
        $region45: #{tpu_custom_call.1} parent=31 // pred_check
          %p1257 = pneg %p133
        $region46: #{tpu_custom_call.1} parent=31 // pred_check_branch
          %1259 = sbr.rel (%p1257) target = $region48
        $region47: #{tpu_custom_call.1} parent=31 // pred_region
          %s1260 = smul.u32 4, %s26
          %s1261 = smul.u32 16, %s25
          %s1263 = ssub.s32 8192, 8192
          %1264 = vsyncadd %s1253, %s1263
          %s1265 = smul.addr %s1260, 16
          %s1266 = sadd.s32 %s1261, %s1265
          %s1267 = smul.addr %s1266, 128
          %s1268 = scalar_lea.hbm %s3, %s1267
          %s1269 = sshll.u32 %s1256, 4
          %s1270 = int_to_ptr.vmem [resolvable:$true] %s1269
          %1275 = dma.vmem_to_hbm [thread:$0]  %s1270, 8192, %s1268, %s1253, 128, 128, 8
        $region48: #{tpu_custom_call.1} parent=31 // pred_fallthru
          _
      $region32: #{tpu_custom_call.1} parent=5 // pred_fallthru
        _
      %p1276 = scmp.le.s32.totalorder 2, %s16
      // Predicated region
      $region49: #{tpu_custom_call.1} parent=5 // pred_check
        %p1277 = pneg %p1276
      $region50: #{tpu_custom_call.1} parent=5 // pred_check_branch
        %1279 = sbr.rel (%p1277) target = $region52
      $region51: #{tpu_custom_call.1} parent=5 // pred_region
        %s1280 = ssub.s32 %s16, 2
        // Predicated region
        $region53: #{tpu_custom_call.1} parent=51 // pred_check
          %p1281 = pneg %p139
        $region54: #{tpu_custom_call.1} parent=51 // pred_check_branch
          %1283 = sbr.rel (%p1281) target = $region56
        $region55: #{tpu_custom_call.1} parent=51 // pred_region
          %s1284 = sand.u32 %s124, 1
          %s1285 = scalar_lea.sflag [#allocation4], %s1284
          %s1286 = sand.u32 %s124, 1
          %s1287 = smul.addr %s1286, 512
          %s1288 = scalar_lea.vmem [#allocation8], %s1287
          %1289 = dma.done %s1285, 8192
        $region56: #{tpu_custom_call.1} parent=51 // pred_fallthru
          _
      $region52: #{tpu_custom_call.1} parent=5 // pred_fallthru
        _
    $region6: #{tpu_custom_call.1} parent=1 // loop_footer
      %s20 = sadd.s32 1, %s16
    $region7: #{tpu_custom_call.1} parent=1 // loop_footer_branch
      %15 = sbr.rel target = $region3
    $region8: #{tpu_custom_call.1} parent=1 // loop_exit
      _
    %1290 = vsyncpa [#allocation3], 1
    %s1291 = scalar_lea.sflag [#allocation3], 1
    %1292 = vsyncpa %s1291, 1
    %1293 = vsyncpa [#allocation6], 1
    %1294 = vsyncpa [#allocation4], 1
    %s1295 = scalar_lea.sflag [#allocation4], 1
    %1296 = vsyncpa %s1295, 1

</llo_original>
